<compile_context>
chip_gen: v7x
topology: tpu7x:2x2x1
jax: 0.10.0
libtpu: 0.0.40
codegen_flags: <defaults>
</compile_context>

<pallas_src>
import functools

import jax
import jax.numpy as jnp
from jax.experimental import pallas as pl
from jax.experimental.pallas import tpu as pltpu


def _round_up(n, m):
    return ((n + m - 1) // m) * m


def _mlp_kernel(x_ref, w1_ref, b1_ref, w2_ref, b2_ref, w3t_ref, b3t_ref, o_ref):
    # Layer 1: (bb, num_in) @ (num_in, 128) -> (bb, 128), f32 accumulation.
    h1 = jnp.dot(x_ref[...], w1_ref[...], preferred_element_type=jnp.float32)
    h1 = jnp.maximum(h1 + b1_ref[...], 0.0)
    # Layer 2: (bb, 128) @ (128, 32) -> (bb, 32).
    h2 = jnp.dot(h1.astype(w2_ref.dtype), w2_ref[...],
                 preferred_element_type=jnp.float32)
    h2 = jnp.maximum(h2 + b2_ref[...], 0.0)
    # Layer 3, transposed ("NT" contraction over the 32-wide feature dim) so
    # the batch dimension lands on the lanes of the output:
    #   (num_out, 32) . (bb, 32)^T -> (num_out, bb)
    out_t = jax.lax.dot_general(
        w3t_ref[...], h2.astype(w3t_ref.dtype),
        (((1,), (1,)), ((), ())),
        preferred_element_type=jnp.float32)
    o_ref[...] = (out_t + b3t_ref[...]).astype(o_ref.dtype)


@functools.partial(jax.jit, static_argnames=("block_b", "use_bf16"))
def representation_transformation(x, params, *, block_b=4096, use_bf16=False):
    """x: (B, num_in) float32 -> (B, num_out) float32 (inference forward)."""
    w1, b1, w2, b2, w3, b3 = params
    B, num_in = x.shape
    num_out = w3.shape[1]

    # Last layer stored transposed so the kernel emits a (num_out, B)
    # batch-on-lanes output (no 128-wide lane padding, no wrapper slice).
    w3t = w3.T          # (num_out, 32)
    b3t = b3.T          # (num_out, 1)

    if use_bf16:
        # bf16 matmuls (single MXU pass) with f32 accumulation; biases stay f32.
        x = x.astype(jnp.bfloat16)
        w1 = w1.astype(jnp.bfloat16)
        w2 = w2.astype(jnp.bfloat16)
        w3t = w3t.astype(jnp.bfloat16)

    # ---- batch tiling -----------------------------------------------------
    # Batch-on-lanes output wants bb to be a multiple of 128 (or == B for one
    # full-array block when B is small).  Clamp bb so the parallel batch axis
    # has >= 2 grid steps whenever possible (v7x has 2 TensorCores).
    if B <= 128:
        bb = B                                    # single full-array block
    else:
        bb = min(block_b, _round_up(-(-B // 2), 128))
        bb = _round_up(bb, 128)
    grid = (pl.cdiv(B, bb),)

    flops = 2 * B * (num_in * 128 + 128 * 32 + 32 * num_out)
    bytes_accessed = (
        x.size * x.dtype.itemsize
        + B * num_out * 4
        + (w1.size + w2.size + w3t.size) * w1.dtype.itemsize
        + (b1.size + b2.size + b3t.size) * 4
    )
    cost = pl.CostEstimate(flops=flops, transcendentals=0,
                           bytes_accessed=bytes_accessed)

    out_t = pl.pallas_call(
        _mlp_kernel,
        out_shape=jax.ShapeDtypeStruct((num_out, B), jnp.float32),
        grid_spec=pltpu.PrefetchScalarGridSpec(
            num_scalar_prefetch=0,
            grid=grid,
            in_specs=[
                pl.BlockSpec((bb, num_in), lambda i: (i, 0)),   # x tile
                pl.BlockSpec(w1.shape, lambda i: (0, 0)),       # W1   (num_in, 128)
                pl.BlockSpec(b1.shape, lambda i: (0, 0)),       # b1   (1, 128)
                pl.BlockSpec(w2.shape, lambda i: (0, 0)),       # W2   (128, 32)
                pl.BlockSpec(b2.shape, lambda i: (0, 0)),       # b2   (1, 32)
                pl.BlockSpec(w3t.shape, lambda i: (0, 0)),      # W3^T (num_out, 32)
                pl.BlockSpec(b3t.shape, lambda i: (0, 0)),      # b3^T (num_out, 1)
            ],
            out_specs=pl.BlockSpec((num_out, bb), lambda i: (0, i)),
        ),
        compiler_params=pltpu.CompilerParams(
            dimension_semantics=("parallel",),
            # Explicit (v5e scoped default is only 16 MiB); safe everywhere.
            vmem_limit_bytes=32 * 1024 * 1024,
        ),
        cost_estimate=cost,
    )(x, w1, b1, w2, b2, w3t, b3t)

    # (num_out, B) -> (B, num_out).  For num_out == 1 this is a free reshape.
    return out_t.T


def init_params(key, num_in=32, num_out=1):
    """Deterministic init mimicking PyTorch Linear default (U[-1/sqrt(fan_in), ...])."""
    dims = [(num_in, 128), (128, 32), (32, num_out)]
    params = []
    for (fan_in, fan_out) in dims:
        key, kw, kb = jax.random.split(key, 3)
        bound = 1.0 / jnp.sqrt(fan_in)
        w = jax.random.uniform(kw, (fan_in, fan_out), jnp.float32, -bound, bound)
        b = jax.random.uniform(kb, (1, fan_out), jnp.float32, -bound, bound)
        params.extend([w, b])
    return tuple(params)


def reference_forward(x, params):
    w1, b1, w2, b2, w3, b3 = params
    h1 = jnp.maximum(x @ w1 + b1, 0.0)
    h2 = jnp.maximum(h1 @ w2 + b2, 0.0)
    return h2 @ w3 + b3


if __name__ == "__main__":
    key = jax.random.PRNGKey(0)
    k_x, k_p = jax.random.split(key)

    num_in, num_out = 32, 1
    params = init_params(k_p, num_in=num_in, num_out=num_out)

    # Small primary check (B = 8): single full-array block path.
    B = 8
    x = jax.random.normal(k_x, (B, num_in), dtype=jnp.float32)
    out = jax.block_until_ready(representation_transformation(x, params))
    ref = reference_forward(x, params)
    assert out.shape == (B, num_out), out.shape
    assert jnp.allclose(out, ref, atol=1e-5, rtol=1e-5), "mismatch vs reference (B=8)"

    # Ragged batch (not a multiple of 128): exercises the masked last block
    # and a >=2-step parallel grid (both TCs on v7x).
    B2 = 200
    x2 = jax.random.normal(k_x, (B2, num_in), dtype=jnp.float32)
    out2 = jax.block_until_ready(representation_transformation(x2, params))
    ref2 = reference_forward(x2, params)
    assert out2.shape == (B2, num_out), out2.shape
    assert jnp.allclose(out2, ref2, atol=1e-5, rtol=1e-5), "mismatch vs reference (B=200)"

    # Optional bf16-matmul path (f32 accumulation): looser tolerance.
    out3 = jax.block_until_ready(
        representation_transformation(x2, params, use_bf16=True))
    assert out3.shape == (B2, num_out), out3.shape
    assert jnp.allclose(out3, ref2, atol=3e-2, rtol=3e-2), "mismatch vs reference (bf16)"

    print("KERNEL_OK")
</pallas_src>

<mosaic_0001>
module attributes {stable_mosaic.version = 11 : i64} {
  func.func @_mlp_kernel(%arg0: i32, %arg1: memref<8x32xf32, #tpu.memory_space<vmem>>, %arg2: memref<32x128xf32, #tpu.memory_space<vmem>>, %arg3: memref<1x128xf32, #tpu.memory_space<vmem>>, %arg4: memref<128x32xf32, #tpu.memory_space<vmem>>, %arg5: memref<1x32xf32, #tpu.memory_space<vmem>>, %arg6: memref<1x32xf32, #tpu.memory_space<vmem>>, %arg7: memref<1x1xf32, #tpu.memory_space<vmem>>, %arg8: memref<1x8xf32, #tpu.memory_space<vmem>>) attributes {dimension_semantics = [#tpu.dimension_semantics<parallel>], iteration_bounds = array<i64: 1>, scalar_prefetch = 0 : i64, scratch_operands = 0 : i64, tpu.core_type = #tpu.core_type<tc>, window_params = [{transform_indices = @transform_0, window_bounds = array<i64: 8, 32>}, {pipeline_mode = #tpu.pipeline_mode<synchronous>, transform_indices = @transform_1, window_bounds = array<i64: 32, 128>}, {pipeline_mode = #tpu.pipeline_mode<synchronous>, transform_indices = @transform_2, window_bounds = array<i64: 1, 128>}, {pipeline_mode = #tpu.pipeline_mode<synchronous>, transform_indices = @transform_3, window_bounds = array<i64: 128, 32>}, {pipeline_mode = #tpu.pipeline_mode<synchronous>, transform_indices = @transform_4, window_bounds = array<i64: 1, 32>}, {pipeline_mode = #tpu.pipeline_mode<synchronous>, transform_indices = @transform_5, window_bounds = array<i64: 1, 32>}, {pipeline_mode = #tpu.pipeline_mode<synchronous>, transform_indices = @transform_6, window_bounds = array<i64: 1, 1>}, {transform_indices = @transform_7, window_bounds = array<i64: 1, 8>}]} {
    %c0 = arith.constant 0 : index
    %c0_0 = arith.constant 0 : index
    %0 = vector.load %arg1[%c0, %c0_0] : memref<8x32xf32, #tpu.memory_space<vmem>>, vector<8x32xf32>
    %c0_1 = arith.constant 0 : index
    %c0_2 = arith.constant 0 : index
    %1 = vector.load %arg2[%c0_1, %c0_2] : memref<32x128xf32, #tpu.memory_space<vmem>>, vector<32x128xf32>
    %cst = arith.constant dense<0.000000e+00> : vector<8x128xf32>
    %2 = tpu.matmul %0, %1, %cst {dimension_numbers = #tpu.dot_dimension_numbers<[1], [0], [0], [1], [0, 0, 1, 1], [], []>} : vector<8x32xf32>, vector<32x128xf32>, vector<8x128xf32> -> vector<8x128xf32>
    %c0_3 = arith.constant 0 : index
    %c0_4 = arith.constant 0 : index
    %3 = vector.load %arg3[%c0_3, %c0_4] : memref<1x128xf32, #tpu.memory_space<vmem>>, vector<1x128xf32>
    %4 = vector.broadcast %3 : vector<1x128xf32> to vector<8x128xf32>
    %5 = arith.addf %2, %4 : vector<8x128xf32>
    %cst_5 = arith.constant 0.000000e+00 : f32
    %6 = vector.broadcast %cst_5 : f32 to vector<8x128xf32>
    %7 = arith.maximumf %5, %6 : vector<8x128xf32>
    %c0_6 = arith.constant 0 : index
    %c0_7 = arith.constant 0 : index
    %8 = vector.load %arg4[%c0_6, %c0_7] : memref<128x32xf32, #tpu.memory_space<vmem>>, vector<128x32xf32>
    %cst_8 = arith.constant dense<0.000000e+00> : vector<8x32xf32>
    %9 = tpu.matmul %7, %8, %cst_8 {dimension_numbers = #tpu.dot_dimension_numbers<[1], [0], [0], [1], [0, 0, 1, 1], [], []>} : vector<8x128xf32>, vector<128x32xf32>, vector<8x32xf32> -> vector<8x32xf32>
    %c0_9 = arith.constant 0 : index
    %c0_10 = arith.constant 0 : index
    %10 = vector.load %arg5[%c0_9, %c0_10] : memref<1x32xf32, #tpu.memory_space<vmem>>, vector<1x32xf32>
    %11 = vector.broadcast %10 : vector<1x32xf32> to vector<8x32xf32>
    %12 = arith.addf %9, %11 : vector<8x32xf32>
    %cst_11 = arith.constant 0.000000e+00 : f32
    %13 = vector.broadcast %cst_11 : f32 to vector<8x32xf32>
    %14 = arith.maximumf %12, %13 : vector<8x32xf32>
    %c0_12 = arith.constant 0 : index
    %c0_13 = arith.constant 0 : index
    %15 = vector.load %arg6[%c0_12, %c0_13] : memref<1x32xf32, #tpu.memory_space<vmem>>, vector<1x32xf32>
    %cst_14 = arith.constant dense<0.000000e+00> : vector<1x8xf32>
    %16 = tpu.matmul %15, %14, %cst_14 {dimension_numbers = #tpu.dot_dimension_numbers<[1], [1], [0], [0], [0, 0, 1, 0], [], []>} : vector<1x32xf32>, vector<8x32xf32>, vector<1x8xf32> -> vector<1x8xf32>
    %c0_15 = arith.constant 0 : index
    %c0_16 = arith.constant 0 : index
    %17 = vector.load %arg7[%c0_15, %c0_16] : memref<1x1xf32, #tpu.memory_space<vmem>>, vector<1x1xf32>
    %18 = vector.broadcast %17 : vector<1x1xf32> to vector<1x8xf32>
    %19 = arith.addf %16, %18 : vector<1x8xf32>
    %c0_17 = arith.constant 0 : index
    %c0_18 = arith.constant 0 : index
    %20 = vector.load %arg8[%c0_17, %c0_18] : memref<1x8xf32, #tpu.memory_space<vmem>>, vector<1x8xf32>
    tpu.vector_store %arg8[%c0_17, %c0_18], %19 {strides = array<i32>} : memref<1x8xf32, #tpu.memory_space<vmem>>, vector<1x8xf32>,
    return
  }
  func.func @transform_0(%arg0: i32) -> (i32, i32) {
    %c0_i32 = arith.constant 0 : i32
    %c0_i32_0 = arith.constant 0 : i32
    return %arg0, %c0_i32 : i32, i32
  }
  func.func @transform_1(%arg0: i32) -> (i32, i32) {
    %c0_i32 = arith.constant 0 : i32
    %c0_i32_0 = arith.constant 0 : i32
    %c0_i32_1 = arith.constant 0 : i32
    return %c0_i32, %c0_i32_0 : i32, i32
  }
  func.func @transform_2(%arg0: i32) -> (i32, i32) {
    %c0_i32 = arith.constant 0 : i32
    %c0_i32_0 = arith.constant 0 : i32
    %c0_i32_1 = arith.constant 0 : i32
    return %c0_i32, %c0_i32_0 : i32, i32
  }
  func.func @transform_3(%arg0: i32) -> (i32, i32) {
    %c0_i32 = arith.constant 0 : i32
    %c0_i32_0 = arith.constant 0 : i32
    %c0_i32_1 = arith.constant 0 : i32
    return %c0_i32, %c0_i32_0 : i32, i32
  }
  func.func @transform_4(%arg0: i32) -> (i32, i32) {
    %c0_i32 = arith.constant 0 : i32
    %c0_i32_0 = arith.constant 0 : i32
    %c0_i32_1 = arith.constant 0 : i32
    return %c0_i32, %c0_i32_0 : i32, i32
  }
  func.func @transform_5(%arg0: i32) -> (i32, i32) {
    %c0_i32 = arith.constant 0 : i32
    %c0_i32_0 = arith.constant 0 : i32
    %c0_i32_1 = arith.constant 0 : i32
    return %c0_i32, %c0_i32_0 : i32, i32
  }
  func.func @transform_6(%arg0: i32) -> (i32, i32) {
    %c0_i32 = arith.constant 0 : i32
    %c0_i32_0 = arith.constant 0 : i32
    %c0_i32_1 = arith.constant 0 : i32
    return %c0_i32, %c0_i32_0 : i32, i32
  }
  func.func @transform_7(%arg0: i32) -> (i32, i32) {
    %c0_i32 = arith.constant 0 : i32
    %c0_i32_0 = arith.constant 0 : i32
    return %c0_i32, %arg0 : i32, i32
  }
}

</mosaic_0001>

<llo_original>
// kernel: representation_transformation.1
$region0: #{representation_transformation.1}
  #allocation0 [shape = 'u32[]', space=smem, size = 0x4, offset = 0x4, fixed_abs, tag = 'smem constant byte address 0x4 - core index']
  #allocation1 [shape = 'u32[144,128]{1,0:T(1,128)}', space=vmem, size = 0x12000, scoped, tag = 'internal scratch']
  #allocation2 [shape = 'f32[1,1]{1,0:T(1,128)S(1)}', space=vmem, size = 0x200, scoped, tag = 'scoped memory for representation_transformation.1']
  %s0 = inlined_call_operand.vmem [shape: f32[8,32], index: 0, kind: input, shape index: {}]
  %s1 = inlined_call_operand.vmem [shape: f32[32,128], index: 1, kind: input, shape index: {}]
  %s2 = inlined_call_operand.vmem [shape: f32[1,128], index: 2, kind: input, shape index: {}]
  %s3 = inlined_call_operand.vmem [shape: f32[128,32], index: 3, kind: input, shape index: {}]
  %s4 = inlined_call_operand.vmem [shape: f32[1,32], index: 4, kind: input, shape index: {}]
  %s5 = inlined_call_operand.vmem [shape: f32[1,32], index: 5, kind: input, shape index: {}]
  %s6 = inlined_call_operand.<no memory space> [shape: f32[1,1], index: 6, kind: input, shape index: {}]
  %s7 = inlined_call_operand.hbm [shape: f32[1,8], index: 7, kind: output, shape index: {}]
  %s8 = sld [smem:[#allocation0]]
  $region38: #{representation_transformation.1} parent=0
    _
  %s10 = ssub.s32 1, %s8
  %s11 = scalar_select 0, %s10, %s8
  %v12 = vstv %s6
  %13 = vst [vmem:[#allocation2] sm:$0x1] %v12
  $region1: #{representation_transformation.1} parent=0
    #allocation3 [shape = 'u8[512]{0}', space=vmem, size = 0x400, scoped, tag = 'output window, operand 0, single buffered']
    #allocation4 [shape = 's32[1]{0}', space=sflag, size = 0x4, scoped, tag = 'scoped memory for representation_transformation.1']
    %14 = vsyncpa [#allocation4], 0
    // Predicated region
    $region2: #{representation_transformation.1} parent=1 // pred_check
      _
    $region3: #{representation_transformation.1} parent=1 // pred_check_branch
      %16 = sbr.rel (0) target = $region5
    $region4: #{representation_transformation.1} parent=1 // pred_region
      _
    $region5: #{representation_transformation.1} parent=1 // pred_fallthru
      _
    // Predicated region
    $region6: #{representation_transformation.1} parent=1 // pred_check
      _
    $region7: #{representation_transformation.1} parent=1 // pred_check_branch
      %18 = sbr.rel (0) target = $region9
    $region8: #{representation_transformation.1} parent=1 // pred_region
      _
    $region9: #{representation_transformation.1} parent=1 // pred_fallthru
      _
    // Predicated region
    $region10: #{representation_transformation.1} parent=1 // pred_check
      _
    $region11: #{representation_transformation.1} parent=1 // pred_check_branch
      %20 = sbr.rel (0) target = $region13
    $region12: #{representation_transformation.1} parent=1 // pred_region
      _
    $region13: #{representation_transformation.1} parent=1 // pred_fallthru
      _
    // Predicated region
    $region14: #{representation_transformation.1} parent=1 // pred_check
      _
    $region15: #{representation_transformation.1} parent=1 // pred_check_branch
      %22 = sbr.rel (0) target = $region17
    $region16: #{representation_transformation.1} parent=1 // pred_region
      _
    $region17: #{representation_transformation.1} parent=1 // pred_fallthru
      _
    // Predicated region
    $region18: #{representation_transformation.1} parent=1 // pred_check
      _
    $region19: #{representation_transformation.1} parent=1 // pred_check_branch
      %24 = sbr.rel (0) target = $region21
    $region20: #{representation_transformation.1} parent=1 // pred_region
      _
    $region21: #{representation_transformation.1} parent=1 // pred_fallthru
      _
    // Predicated region
    $region22: #{representation_transformation.1} parent=1 // pred_check
      _
    $region23: #{representation_transformation.1} parent=1 // pred_check_branch
      %26 = sbr.rel (0) target = $region25
    $region24: #{representation_transformation.1} parent=1 // pred_region
      _
    $region25: #{representation_transformation.1} parent=1 // pred_fallthru
      _
    // Predicated region
    $region26: #{representation_transformation.1} parent=1 // pred_check
      _
    $region27: #{representation_transformation.1} parent=1 // pred_check_branch
      %28 = sbr.rel (0) target = $region29
    $region28: #{representation_transformation.1} parent=1 // pred_region
      _
    $region29: #{representation_transformation.1} parent=1 // pred_fallthru
      _
    %v29 = vld [vmem:[%s0] sm:$0xff]
    %v30 = vld [vmem:[%s1] sm:$0xff]
    %v31 = vld [vmem:[%s1 + $0x8] sm:$0xff]
    %v32 = vld [vmem:[%s1 + $0x10] sm:$0xff]
    %v33 = vld [vmem:[%s1 + $0x18] sm:$0xff]
    %v34 = vld [vmem:[%s2] sm:$0x1]
    %v36 = vlaneseq
    %v37 = vshrl.u32 %v36, 7
    %v38 = vsub.s32 0, %v37
    %v39 = vrot.slane %v34, %v38
    %vm41 = vcmask 261120
    %v43 = vsel %vm41, %v29, 0
    %45 = vmatprep.subr.mxu0 0.0
    %46 = vmatpush1.msra.mxu0 %v30
    %47 = vmatprep.subr.mxu0 0.0
    %48 = vmatpush1.msra.mxu0 %v31
    %49 = vmatprep.subr.mxu0 0.0
    %50 = vmatpush1.msra.mxu0 %v32
    %51 = vmatprep.subr.mxu0 0.0
    %52 = vmatpush1.msra.mxu0 %v33
    %53 = vmatprep.subr.mxu0 0.0
    %54 = vmatpush1.msra.mxu0 0.0
    %55 = vmatprep.subr.mxu0 0.0
    %56 = vmatpush1.msra.mxu0 0.0
    %57 = vmatprep.subr.mxu0 0.0
    %58 = vmatpush1.msra.mxu0 0.0
    %59 = vmatprep.subr.mxu0 0.0
    %60 = vmatpush1.msra.mxu0 0.0
    %61 = vmatprep.subr.mxu0 0.0
    %62 = vmatpush1.msra.mxu0 0.0
    %63 = vmatprep.subr.mxu0 0.0
    %64 = vmatpush1.msra.mxu0 0.0
    %65 = vmatprep.subr.mxu0 0.0
    %66 = vmatpush1.msra.mxu0 0.0
    %67 = vmatprep.subr.mxu0 0.0
    %68 = vmatpush1.msra.mxu0 0.0
    %69 = vmatprep.subr.mxu0 0.0
    %70 = vmatpush1.msra.mxu0 0.0
    %71 = vmatprep.subr.mxu0 0.0
    %72 = vmatpush1.msra.mxu0 0.0
    %73 = vmatprep.subr.mxu0 0.0
    %74 = vmatpush1.msra.mxu0 0.0
    %75 = vmatprep.subr.mxu0 0.0
    %76 = vmatpush1.msra.mxu0 0.0
    %77 = vmatprep.subr.mxu0 0.0
    %78 = vmatpush1.msra.mxu0 0.0
    %79 = vmatprep.subr.mxu0 0.0
    %80 = vmatpush1.msra.mxu0 0.0
    %81 = vmatprep.subr.mxu0 0.0
    %82 = vmatpush1.msra.mxu0 0.0
    %83 = vmatprep.subr.mxu0 0.0
    %84 = vmatpush1.msra.mxu0 0.0
    %85 = vmatprep.subr.mxu0 0.0
    %86 = vmatpush1.msra.mxu0 0.0
    %87 = vmatprep.subr.mxu0 0.0
    %88 = vmatpush1.msra.mxu0 0.0
    %89 = vmatprep.subr.mxu0 0.0
    %90 = vmatpush1.msra.mxu0 0.0
    %91 = vmatprep.subr.mxu0 0.0
    %92 = vmatpush1.msra.mxu0 0.0
    %93 = vmatprep.subr.mxu0 0.0
    %94 = vmatpush1.msra.mxu0 0.0
    %95 = vmatprep.subr.mxu0 0.0
    %96 = vmatpush1.msra.mxu0 0.0
    %97 = vmatprep.subr.mxu0 0.0
    %98 = vmatpush1.msra.mxu0 0.0
    %99 = vmatprep.subr.mxu0 0.0
    %100 = vmatpush1.msra.mxu0 0.0
    %101 = vmatprep.subr.mxu0 0.0
    %102 = vmatpush1.msra.mxu0 0.0
    %103 = vmatprep.subr.mxu0 0.0
    %104 = vmatpush1.msra.mxu0 0.0
    %105 = vmatprep.subr.mxu0 0.0
    %106 = vmatpush1.msra.mxu0 0.0
    %107 = vmatprep.subr.mxu0 0.0
    %108 = vmatpush1.msra.mxu0 0.0
    %109 = vmatprep.mubr.f32.mxu0 0.0
    %110 = vmatmul.mubr.f32.gmra.mrb[0].mxu0 %v43
    %v111 = vpop.f32.mrb[0].mxu0
    %v112 = vadd.f32 %v39, %v111
    %v113 = vpop.f32.mrb[0].mxu0
    %114 = vdwg.mxu0
    %v115 = vmax.f32 %v112, 0.0
    %v116 = vld [vmem:[%s3] sm:$0xff]
    %v117 = vld [vmem:[%s3 + $0x8] sm:$0xff]
    %v118 = vld [vmem:[%s3 + $0x10] sm:$0xff]
    %v119 = vld [vmem:[%s3 + $0x18] sm:$0xff]
    %v120 = vld [vmem:[%s3 + $0x20] sm:$0xff]
    %v121 = vld [vmem:[%s3 + $0x28] sm:$0xff]
    %v122 = vld [vmem:[%s3 + $0x30] sm:$0xff]
    %v123 = vld [vmem:[%s3 + $0x38] sm:$0xff]
    %v124 = vld [vmem:[%s3 + $0x40] sm:$0xff]
    %v125 = vld [vmem:[%s3 + $0x48] sm:$0xff]
    %v126 = vld [vmem:[%s3 + $0x50] sm:$0xff]
    %v127 = vld [vmem:[%s3 + $0x58] sm:$0xff]
    %v128 = vld [vmem:[%s3 + $0x60] sm:$0xff]
    %v129 = vld [vmem:[%s3 + $0x68] sm:$0xff]
    %v130 = vld [vmem:[%s3 + $0x70] sm:$0xff]
    %v131 = vld [vmem:[%s3 + $0x78] sm:$0xff]
    %v132 = vld [vmem:[%s4] sm:$0x1]
    %v134 = vlaneseq
    %v135 = vshrl.u32 %v134, 7
    %v136 = vsub.s32 0, %v135
    %v137 = vrot.slane %v132, %v136
    %139 = vmatprep.subr.mxu0 0.0
    %140 = vmatpush1.msra.mxu0 %v116
    %141 = vmatprep.subr.mxu0 0.0
    %142 = vmatpush1.msra.mxu0 %v117
    %143 = vmatprep.subr.mxu0 0.0
    %144 = vmatpush1.msra.mxu0 %v118
    %145 = vmatprep.subr.mxu0 0.0
    %146 = vmatpush1.msra.mxu0 %v119
    %147 = vmatprep.subr.mxu0 0.0
    %148 = vmatpush1.msra.mxu0 %v120
    %149 = vmatprep.subr.mxu0 0.0
    %150 = vmatpush1.msra.mxu0 %v121
    %151 = vmatprep.subr.mxu0 0.0
    %152 = vmatpush1.msra.mxu0 %v122
    %153 = vmatprep.subr.mxu0 0.0
    %154 = vmatpush1.msra.mxu0 %v123
    %155 = vmatprep.subr.mxu0 0.0
    %156 = vmatpush1.msra.mxu0 %v124
    %157 = vmatprep.subr.mxu0 0.0
    %158 = vmatpush1.msra.mxu0 %v125
    %159 = vmatprep.subr.mxu0 0.0
    %160 = vmatpush1.msra.mxu0 %v126
    %161 = vmatprep.subr.mxu0 0.0
    %162 = vmatpush1.msra.mxu0 %v127
    %163 = vmatprep.subr.mxu0 0.0
    %164 = vmatpush1.msra.mxu0 %v128
    %165 = vmatprep.subr.mxu0 0.0
    %166 = vmatpush1.msra.mxu0 %v129
    %167 = vmatprep.subr.mxu0 0.0
    %168 = vmatpush1.msra.mxu0 %v130
    %169 = vmatprep.subr.mxu0 0.0
    %170 = vmatpush1.msra.mxu0 %v131
    %171 = vmatprep.subr.mxu0 0.0
    %172 = vmatpush1.msra.mxu0 0.0
    %173 = vmatprep.subr.mxu0 0.0
    %174 = vmatpush1.msra.mxu0 0.0
    %175 = vmatprep.subr.mxu0 0.0
    %176 = vmatpush1.msra.mxu0 0.0
    %177 = vmatprep.subr.mxu0 0.0
    %178 = vmatpush1.msra.mxu0 0.0
    %179 = vmatprep.subr.mxu0 0.0
    %180 = vmatpush1.msra.mxu0 0.0
    %181 = vmatprep.subr.mxu0 0.0
    %182 = vmatpush1.msra.mxu0 0.0
    %183 = vmatprep.subr.mxu0 0.0
    %184 = vmatpush1.msra.mxu0 0.0
    %185 = vmatprep.subr.mxu0 0.0
    %186 = vmatpush1.msra.mxu0 0.0
    %187 = vmatprep.subr.mxu0 0.0
    %188 = vmatpush1.msra.mxu0 0.0
    %189 = vmatprep.subr.mxu0 0.0
    %190 = vmatpush1.msra.mxu0 0.0
    %191 = vmatprep.subr.mxu0 0.0
    %192 = vmatpush1.msra.mxu0 0.0
    %193 = vmatprep.subr.mxu0 0.0
    %194 = vmatpush1.msra.mxu0 0.0
    %195 = vmatprep.subr.mxu0 0.0
    %196 = vmatpush1.msra.mxu0 0.0
    %197 = vmatprep.subr.mxu0 0.0
    %198 = vmatpush1.msra.mxu0 0.0
    %199 = vmatprep.subr.mxu0 0.0
    %200 = vmatpush1.msra.mxu0 0.0
    %201 = vmatprep.subr.mxu0 0.0
    %202 = vmatpush1.msra.mxu0 0.0
    %203 = vmatprep.mubr.f32.mxu0 0.0
    %204 = vmatmul.mubr.f32.gmra.mrb[0].mxu0 %v115
    %v205 = vpop.f32.mrb[0].mxu0
    %v206 = vadd.f32 %v137, %v205
    %v207 = vpop.f32.mrb[0].mxu0
    %208 = vdwg.mxu0
    %v209 = vmax.f32 %v206, 0.0
    %v210 = vld [vmem:[%s5] sm:$0x1]
    %v211 = vld [vmem:[#allocation2] sm:$0x1]
    %213 = vset.pattern.permute.xlu0 0
    %214 = vperm.xlu0 %213, %v211
    %v215 = vpop.permute.xlu0 %214
    %v217 = vlaneseq
    %v218 = vshrl.u32 %v217, 7
    %v219 = vsub.s32 0, %v218
    %v220 = vrot.slane %v215, %v219
    %v222 = vsel %vm41, %v210, 0
    %v225 = vsel %vm41, %v209, 0
    %227 = vmatprep.subr.mxu0 0.0
    %228 = vmatpush1.xpose.msra.mxu0 %v225
    %229 = vmatprep.subr.mxu0 0.0
    %230 = vmatpush1.xpose.msra.mxu0 0.0
    %231 = vmatprep.subr.mxu0 0.0
    %232 = vmatpush1.xpose.msra.mxu0 0.0
    %233 = vmatprep.subr.mxu0 0.0
    %234 = vmatpush1.xpose.msra.mxu0 0.0
    %235 = vmatprep.subr.mxu0 0.0
    %236 = vmatpush1.xpose.msra.mxu0 0.0
    %237 = vmatprep.subr.mxu0 0.0
    %238 = vmatpush1.xpose.msra.mxu0 0.0
    %239 = vmatprep.subr.mxu0 0.0
    %240 = vmatpush1.xpose.msra.mxu0 0.0
    %241 = vmatprep.subr.mxu0 0.0
    %242 = vmatpush1.xpose.msra.mxu0 0.0
    %243 = vmatprep.subr.mxu0 0.0
    %244 = vmatpush1.xpose.msra.mxu0 0.0
    %245 = vmatprep.subr.mxu0 0.0
    %246 = vmatpush1.xpose.msra.mxu0 0.0
    %247 = vmatprep.subr.mxu0 0.0
    %248 = vmatpush1.xpose.msra.mxu0 0.0
    %249 = vmatprep.subr.mxu0 0.0
    %250 = vmatpush1.xpose.msra.mxu0 0.0
    %251 = vmatprep.subr.mxu0 0.0
    %252 = vmatpush1.xpose.msra.mxu0 0.0
    %253 = vmatprep.subr.mxu0 0.0
    %254 = vmatpush1.xpose.msra.mxu0 0.0
    %255 = vmatprep.subr.mxu0 0.0
    %256 = vmatpush1.xpose.msra.mxu0 0.0
    %257 = vmatprep.subr.mxu0 0.0
    %258 = vmatpush1.xpose.msra.mxu0 0.0
    %259 = vmatprep.subr.mxu0 0.0
    %260 = vmatpush1.xpose.msra.mxu0 0.0
    %261 = vmatprep.subr.mxu0 0.0
    %262 = vmatpush1.xpose.msra.mxu0 0.0
    %263 = vmatprep.subr.mxu0 0.0
    %264 = vmatpush1.xpose.msra.mxu0 0.0
    %265 = vmatprep.subr.mxu0 0.0
    %266 = vmatpush1.xpose.msra.mxu0 0.0
    %267 = vmatprep.subr.mxu0 0.0
    %268 = vmatpush1.xpose.msra.mxu0 0.0
    %269 = vmatprep.subr.mxu0 0.0
    %270 = vmatpush1.xpose.msra.mxu0 0.0
    %271 = vmatprep.subr.mxu0 0.0
    %272 = vmatpush1.xpose.msra.mxu0 0.0
    %273 = vmatprep.subr.mxu0 0.0
    %274 = vmatpush1.xpose.msra.mxu0 0.0
    %275 = vmatprep.subr.mxu0 0.0
    %276 = vmatpush1.xpose.msra.mxu0 0.0
    %277 = vmatprep.subr.mxu0 0.0
    %278 = vmatpush1.xpose.msra.mxu0 0.0
    %279 = vmatprep.subr.mxu0 0.0
    %280 = vmatpush1.xpose.msra.mxu0 0.0
    %281 = vmatprep.subr.mxu0 0.0
    %282 = vmatpush1.xpose.msra.mxu0 0.0
    %283 = vmatprep.subr.mxu0 0.0
    %284 = vmatpush1.xpose.msra.mxu0 0.0
    %285 = vmatprep.subr.mxu0 0.0
    %286 = vmatpush1.xpose.msra.mxu0 0.0
    %287 = vmatprep.subr.mxu0 0.0
    %288 = vmatpush1.xpose.msra.mxu0 0.0
    %289 = vmatprep.subr.mxu0 0.0
    %290 = vmatpush1.xpose.msra.mxu0 0.0
    %291 = vmatprep.mubr.f32.mxu0 0.0
    %292 = vmatmul.mubr.f32.gmra.mrb[0].mxu0 %v222
    %v293 = vpop.f32.mrb[0].mxu0
    %v294 = vadd.f32 %v220, %v293
    %v295 = vpop.f32.mrb[0].mxu0
    %296 = vdwg.mxu0
    %vm297 = vcmask 57344
    %298 = vst.msk [vmem:[#allocation3] sm:$0x1] %vm297, %v294
    // Predicated region
    $region30: #{representation_transformation.1} parent=1 // pred_check
      _
    $region31: #{representation_transformation.1} parent=1 // pred_check_branch
      %300 = sbr.rel (0) target = $region33
    $region32: #{representation_transformation.1} parent=1 // pred_region
      %s302 = ssub.s32 16, 16
      %303 = vsyncadd [#allocation4], %s302
      %s305 = sshll.u32 [#allocation3], 4
      %s306 = int_to_ptr.vmem [resolvable:$true] %s305
      %308 = dma.vmem_to_hbm [thread:$0]  %s306, 16, %s7, [#allocation4]
    $region33: #{representation_transformation.1} parent=1 // pred_fallthru
      _
    // Predicated region
    $region34: #{representation_transformation.1} parent=1 // pred_check
      _
    $region35: #{representation_transformation.1} parent=1 // pred_check_branch
      %310 = sbr.rel (0) target = $region37
    $region36: #{representation_transformation.1} parent=1 // pred_region
      %311 = dma.done [#allocation4], 16
    $region37: #{representation_transformation.1} parent=1 // pred_fallthru
      _
    %312 = vsyncpa [#allocation4], 1

</llo_original>
